<compile_context>
chip_gen: v6e
topology: v6e:2x2x1
jax: 0.10.0
libtpu: 0.0.40
codegen_flags: <defaults>
</compile_context>

<pallas_src>
import functools

import jax
import jax.numpy as jnp
from jax import lax
from jax.experimental import pallas as pl
from jax.experimental.pallas import tpu as pltpu


def _round_up(x, m):
    return (x + m - 1) // m * m


def _maybe_vmem_limit(est_bytes):
    # Raise the scoped-VMEM cap only when the per-step estimate approaches the
    # v5e default (16 MiB); stay well under v7x's 64 MiB physical VMEM.
    if est_bytes <= 12 * 1024 * 1024:
        return None
    return min(int(est_bytes * 1.5), 40 * 1024 * 1024)


# -----------------------------------------------------------------------------
# Pass 1: pointwise_conv1 -> GLU -> depthwise conv, plus BN partial statistics.
# -----------------------------------------------------------------------------
def _pass1_kernel(x_ref, xprev_ref, xnext_ref, w1_ref, b1_ref, dw_ref, bdw_ref,
                  y_ref, stats_ref, xe_ref,
                  *, tile_t, halo, kernel_size, pad):
    t = pl.program_id(1)
    n_t = pl.num_programs(1)
    te = tile_t + 2 * halo
    cp = dw_ref.shape[-1]
    mdt = xe_ref.dtype

    # Assemble [prev halo | tile | next halo] into a VMEM scratch; x is read
    # unpadded (C channels) and the cast to the MXU dtype is folded in here.
    xe_ref[0:halo, :] = xprev_ref[0, :, :].astype(mdt)
    xe_ref[halo:halo + tile_t, :] = x_ref[0, :, :].astype(mdt)
    xe_ref[halo + tile_t:te, :] = xnext_ref[0, :, :].astype(mdt)
    xe = xe_ref[...]                                        # (TE, C)

    # pointwise_conv1 (Conv1d k=1) == matmul over channels on the MXU.  The
    # weight's output dim is padded to 2*Cp so the GLU halves split on a
    # 128-lane boundary (pad columns are zero -> pad lanes of h/g stay zero).
    h = jnp.dot(xe, w1_ref[...], preferred_element_type=jnp.float32)
    h = h + b1_ref[...]                                     # (TE, 2*Cp) f32

    # GLU over channels: first half * sigmoid(second half).
    g = h[:, :cp] * jax.nn.sigmoid(h[:, cp:])               # (TE, Cp) f32

    # 'same' zero padding of the depthwise input: halo rows that fall outside
    # [0, T) must act as zeros.  Single fused select, no padded copy.
    row = lax.broadcasted_iota(jnp.int32, (te, 1), 0)
    oob = ((t == 0) & (row < halo)) | ((t == n_t - 1) & (row >= halo + tile_t))
    g = jnp.where(oob, 0.0, g)

    # Depthwise conv over time (groups=C): K shifted multiply-adds (VPU).
    # TODO(synk): for large K (e.g. 31) switch to lax.fori_loop + a VMEM
    # accumulator and generate the shifts with pltpu.roll (XLU co-issue); on
    # v6e/v7x a bf16 depthwise would halve VALU pressure.
    dw = dw_ref[...]                                        # (K, Cp) f32
    s0 = halo - pad
    acc = g[s0:s0 + tile_t, :] * dw[0:1, :]
    for k in range(1, kernel_size):
        acc = acc + g[s0 + k:s0 + k + tile_t, :] * dw[k:k + 1, :]
    y = acc + bdw_ref[...]                                  # (TILE_T, Cp) f32

    y_ref[0, :, :] = y.astype(y_ref.dtype)                  # bf16 HBM round trip

    # Per-tile partial BatchNorm statistics, taken from the f32 value.
    # TODO(synk): switch to centered/Welford partials if B*T becomes huge.
    stats_ref[0, 0, 0:1, :] = jnp.sum(y, axis=0, keepdims=True)
    stats_ref[0, 0, 1:2, :] = jnp.sum(y * y, axis=0, keepdims=True)


# -----------------------------------------------------------------------------
# Pass 2: folded BatchNorm affine -> Swish -> pointwise_conv2.
# -----------------------------------------------------------------------------
def _pass2_kernel(y_ref, scale_ref, shift_ref, w2_ref, b2_ref, o_ref):
    y = y_ref[...].astype(jnp.float32)                      # (TILE_M, Cp)
    yn = y * scale_ref[...] + shift_ref[...]                 # BatchNorm (folded)
    s = yn * jax.nn.sigmoid(yn)                              # Swish
    out = jnp.dot(s.astype(w2_ref.dtype), w2_ref[...],
                  preferred_element_type=jnp.float32)        # (TILE_M, C)
    o_ref[...] = (out + b2_ref[...]).astype(o_ref.dtype)     # unpadded output


# -----------------------------------------------------------------------------
# Wrapper
# -----------------------------------------------------------------------------
def convolution_module(x, params, *, kernel_size, eps=1e-5,
                       tile_t=None, tile_m=None, max_tile_rows=512,
                       use_bf16_matmul=True, interm_dtype=jnp.bfloat16):
    """ConvolutionModule forward.

    x: (B, T, C) float32.
    params = (w1, b1, dw, bdw, gamma, beta, w2, b2) with layouts
      w1:(C,2C) b1:(1,2C) dw:(K,C) bdw:(1,C) gamma/beta:(1,C) w2:(C,C) b2:(1,C).
    Returns (B, T, C) in x.dtype.  BatchNorm uses training-mode batch stats
    (matches a freshly constructed nn.BatchNorm1d in train mode).
    """
    B, T, C = x.shape
    w1, b1, dw, bdw, gamma, beta, w2, b2 = params
    K = kernel_size
    assert (K - 1) % 2 == 0, "kernel_size must be odd"
    pad = (K - 1) // 2

    f32 = jnp.float32
    mdt = jnp.bfloat16 if use_bf16_matmul else jnp.float32

    # ---- lane-dense channel padding of the (small) weights only --------------
    Cp = max(128, _round_up(C, 128))
    w1p = jnp.zeros((C, 2 * Cp), f32)
    w1p = w1p.at[:, :C].set(w1[:, :C].astype(f32))
    w1p = w1p.at[:, Cp:Cp + C].set(w1[:, C:].astype(f32))
    b1p = jnp.zeros((1, 2 * Cp), f32)
    b1p = b1p.at[:, :C].set(b1.reshape(1, 2 * C)[:, :C].astype(f32))
    b1p = b1p.at[:, Cp:Cp + C].set(b1.reshape(1, 2 * C)[:, C:].astype(f32))
    dwp = jnp.zeros((K, Cp), f32).at[:, :C].set(dw.astype(f32))

    def _padc(v):
        return jnp.zeros((1, Cp), f32).at[:, :C].set(v.reshape(1, C).astype(f32))

    bdwp, gammap, betap = map(_padc, (bdw, gamma, beta))
    w2p = jnp.zeros((Cp, C), f32).at[:C, :].set(w2.astype(f32))
    b2p = b2.reshape(1, C).astype(f32)

    w1m = w1p.astype(mdt)
    w2m = w2p.astype(mdt)

    # ---- time tiling: halo (>= pad, multiple of 8, divides T) ---------------
    # TODO(synk): T values with no multiple-of-8 divisor >= pad (ragged T) are
    # not handled; they would need time padding with masked BN statistics.
    halo = None
    h = _round_up(max(pad, 1), 8)
    while h <= T:
        if T % h == 0:
            halo = h
            break
        h += 8
    assert halo is not None, "T must admit a multiple-of-8 halo >= pad"

    if tile_t is None:
        tile_t = halo
        m = halo
        while m <= min(T, max_tile_rows):
            if T % m == 0:
                tile_t = m
            m += halo
    assert T % tile_t == 0 and tile_t % halo == 0 and halo >= pad
    nT = T // tile_t
    ratio = tile_t // halo
    n_halo_blocks = T // halo
    TE = tile_t + 2 * halo

    mdt_b = jnp.dtype(mdt).itemsize
    ib = jnp.dtype(interm_dtype).itemsize

    # ---- pass 1 --------------------------------------------------------------
    est1 = (2 * tile_t * C * 4 + 4 * halo * C * 4            # x + halos (2 bufs)
            + 2 * C * 2 * Cp * mdt_b                          # w1
            + 2 * (2 * Cp + (K + 1) * Cp) * 4                 # small params
            + 2 * tile_t * Cp * ib + 2 * 2 * Cp * 4           # y + stats
            + TE * C * mdt_b                                  # xe scratch
            + 3 * TE * 2 * Cp * 4)                            # h/g/acc temps
    kernel1 = functools.partial(_pass1_kernel, tile_t=tile_t, halo=halo,
                                kernel_size=K, pad=pad)
    y, stats = pl.pallas_call(
        kernel1,
        out_shape=(jax.ShapeDtypeStruct((B, T, Cp), interm_dtype),
                   jax.ShapeDtypeStruct((B, nT, 2, Cp), jnp.float32)),
        grid_spec=pltpu.PrefetchScalarGridSpec(
            num_scalar_prefetch=0,
            grid=(B, nT),
            in_specs=[
                pl.BlockSpec((1, tile_t, C), lambda b, t: (b, t, 0)),
                pl.BlockSpec((1, halo, C),
                             lambda b, t: (b, jnp.maximum(t * ratio - 1, 0), 0)),
                pl.BlockSpec((1, halo, C),
                             lambda b, t: (b, jnp.minimum((t + 1) * ratio,
                                                          n_halo_blocks - 1), 0)),
                pl.BlockSpec((C, 2 * Cp), lambda b, t: (0, 0)),   # w1 (resident)
                pl.BlockSpec((1, 2 * Cp), lambda b, t: (0, 0)),   # b1
                pl.BlockSpec((K, Cp), lambda b, t: (0, 0)),       # depthwise w
                pl.BlockSpec((1, Cp), lambda b, t: (0, 0)),       # depthwise b
            ],
            out_specs=(
                pl.BlockSpec((1, tile_t, Cp), lambda b, t: (b, t, 0)),
                pl.BlockSpec((1, 1, 2, Cp), lambda b, t: (b, t, 0, 0)),
            ),
            scratch_shapes=[pltpu.VMEM((TE, C), mdt)],
        ),
        compiler_params=pltpu.CompilerParams(
            dimension_semantics=("parallel", "parallel"),
            vmem_limit_bytes=_maybe_vmem_limit(est1)),
    )(x, x, x, w1m, b1p, dwp, bdwp)

    # ---- finalize training-mode BatchNorm (tiny per-channel math) -----------
    n = B * T
    ssum = jnp.sum(stats[:, :, 0, :], axis=(0, 1))            # (Cp,)
    ssq = jnp.sum(stats[:, :, 1, :], axis=(0, 1))             # (Cp,)
    mean = ssum / n
    var = jnp.maximum(ssq / n - mean * mean, 0.0)              # biased var (BN)
    inv_std = lax.rsqrt(var + eps)
    scale = (gammap[0] * inv_std).reshape(1, Cp)
    shift = (betap[0] - mean * gammap[0] * inv_std).reshape(1, Cp)

    # ---- pass 2 (own large tile, unpadded output) ----------------------------
    M = B * T
    if tile_m is None:
        cap = min(M, 1024)
        tile_m = 8
        m = cap - (cap % 8)
        while m >= 8:
            if M % m == 0:
                tile_m = m
                break
            m -= 8
    assert M % tile_m == 0 and tile_m % 8 == 0

    est2 = (2 * tile_m * Cp * ib + 2 * 2 * Cp * 4             # y + scale/shift
            + 2 * Cp * C * mdt_b + 2 * C * 4                   # w2 + b2
            + 2 * tile_m * C * 4                               # output
            + 3 * tile_m * Cp * 4)                             # temporaries
    out = pl.pallas_call(
        _pass2_kernel,
        out_shape=jax.ShapeDtypeStruct((M, C), x.dtype),
        grid_spec=pltpu.PrefetchScalarGridSpec(
            num_scalar_prefetch=0,
            grid=(M // tile_m,),
            in_specs=[
                pl.BlockSpec((tile_m, Cp), lambda i: (i, 0)),
                pl.BlockSpec((1, Cp), lambda i: (0, 0)),       # scale (resident)
                pl.BlockSpec((1, Cp), lambda i: (0, 0)),       # shift
                pl.BlockSpec((Cp, C), lambda i: (0, 0)),       # w2
                pl.BlockSpec((1, C), lambda i: (0, 0)),        # b2
            ],
            out_specs=pl.BlockSpec((tile_m, C), lambda i: (i, 0)),
        ),
        compiler_params=pltpu.CompilerParams(
            dimension_semantics=("parallel",),
            vmem_limit_bytes=_maybe_vmem_limit(est2)),
    )(y.reshape(M, Cp), scale, shift, w2m, b2p)

    return out.reshape(B, T, C)


# -----------------------------------------------------------------------------
# Pure-JAX reference mirroring the PyTorch forward (training-mode BatchNorm).
# -----------------------------------------------------------------------------
def _reference(x, params, *, kernel_size, eps=1e-5):
    B, T, C = x.shape
    w1, b1, dw, bdw, gamma, beta, w2, b2 = params
    pad = (kernel_size - 1) // 2
    hi = jax.lax.Precision.HIGHEST

    h = jnp.einsum("btc,cd->btd", x, w1, precision=hi) + b1.reshape(1, 1, -1)
    g = h[..., :C] * jax.nn.sigmoid(h[..., C:])
    gp = jnp.pad(g, ((0, 0), (pad, pad), (0, 0)))
    y = sum(gp[:, k:k + T, :] * dw[k].reshape(1, 1, C)
            for k in range(kernel_size)) + bdw.reshape(1, 1, C)
    mean = jnp.mean(y, axis=(0, 1), keepdims=True)
    var = jnp.mean((y - mean) ** 2, axis=(0, 1), keepdims=True)
    yn = (y - mean) / jnp.sqrt(var + eps) * gamma.reshape(1, 1, C) \
        + beta.reshape(1, 1, C)
    s = yn * jax.nn.sigmoid(yn)
    return jnp.einsum("btc,cd->btd", s, w2, precision=hi) + b2.reshape(1, 1, C)


if __name__ == "__main__":
    B, T, C, K = 2, 128, 48, 7   # batch, time, channels, odd kernel_size

    key = jax.random.PRNGKey(0)
    keys = jax.random.split(key, 9)
    x = jax.random.normal(keys[0], (B, T, C), jnp.float32)

    w1 = jax.random.normal(keys[1], (C, 2 * C), jnp.float32) * 0.2
    b1 = jax.random.normal(keys[2], (1, 2 * C), jnp.float32) * 0.1
    dw = jax.random.normal(keys[3], (K, C), jnp.float32) * 0.2
    bdw = jax.random.normal(keys[4], (1, C), jnp.float32) * 0.1
    gamma = 1.0 + 0.1 * jax.random.normal(keys[5], (1, C), jnp.float32)
    beta = 0.1 * jax.random.normal(keys[6], (1, C), jnp.float32)
    w2 = jax.random.normal(keys[7], (C, C), jnp.float32) * 0.2
    b2 = jax.random.normal(keys[8], (1, C), jnp.float32) * 0.1
    params = (w1, b1, dw, bdw, gamma, beta, w2, b2)

    ref = _reference(x, params, kernel_size=K)

    # Strict f32 path (f32 MXU operands + f32 intermediate): tight check vs the
    # PyTorch-style reference.  tile_t=32 forces 4 time tiles per batch so the
    # halo handling is exercised.
    out_f32 = convolution_module(x, params, kernel_size=K, tile_t=32,
                                 use_bf16_matmul=False,
                                 interm_dtype=jnp.float32)
    out_f32 = jax.block_until_ready(out_f32)
    assert out_f32.shape == (B, T, C)
    assert jnp.allclose(out_f32, ref, atol=1e-3, rtol=1e-3), (
        "f32 kernel mismatch vs reference, max abs diff = %g"
        % float(jnp.max(jnp.abs(out_f32 - ref))))

    # Default perf path (bf16 MXU operands + bf16 intermediate, large tiles):
    # loose sanity bound only — bf16 inputs/intermediate introduce ~1e-2-level
    # differences vs the f32 reference.
    out_perf = convolution_module(x, params, kernel_size=K)
    out_perf = jax.block_until_ready(out_perf)
    assert out_perf.shape == (B, T, C)
    assert float(jnp.max(jnp.abs(out_perf - ref))) < 0.25, (
        "bf16 kernel diverged from reference")

    print("KERNEL_OK")
</pallas_src>

<mosaic_0001>
module attributes {stable_mosaic.version = 11 : i64} {
  func.func @_pass1_kernel(%arg0: i32, %arg1: i32, %arg2: memref<1x32x48xf32, #tpu.memory_space<vmem>>, %arg3: memref<1x8x48xf32, #tpu.memory_space<vmem>>, %arg4: memref<1x8x48xf32, #tpu.memory_space<vmem>>, %arg5: memref<48x256xf32, #tpu.memory_space<vmem>>, %arg6: memref<1x256xf32, #tpu.memory_space<vmem>>, %arg7: memref<7x128xf32, #tpu.memory_space<vmem>>, %arg8: memref<1x128xf32, #tpu.memory_space<vmem>>, %arg9: memref<1x32x128xf32, #tpu.memory_space<vmem>>, %arg10: memref<1x1x2x128xf32, #tpu.memory_space<vmem>>, %arg11: memref<48x48xf32, #tpu.memory_space<vmem>>) attributes {dimension_semantics = [#tpu.dimension_semantics<parallel>, #tpu.dimension_semantics<parallel>], iteration_bounds = array<i64: 2, 4>, scalar_prefetch = 0 : i64, scratch_operands = 1 : i64, tpu.core_type = #tpu.core_type<tc>, window_params = [{transform_indices = @transform_0, window_bounds = array<i64: 1, 32, 48>}, {transform_indices = @transform_1, window_bounds = array<i64: 1, 8, 48>}, {transform_indices = @transform_2, window_bounds = array<i64: 1, 8, 48>}, {pipeline_mode = #tpu.pipeline_mode<synchronous>, transform_indices = @transform_3, window_bounds = array<i64: 48, 256>}, {pipeline_mode = #tpu.pipeline_mode<synchronous>, transform_indices = @transform_4, window_bounds = array<i64: 1, 256>}, {pipeline_mode = #tpu.pipeline_mode<synchronous>, transform_indices = @transform_5, window_bounds = array<i64: 7, 128>}, {pipeline_mode = #tpu.pipeline_mode<synchronous>, transform_indices = @transform_6, window_bounds = array<i64: 1, 128>}, {transform_indices = @transform_7, window_bounds = array<i64: 1, 32, 128>}, {transform_indices = @transform_8, window_bounds = array<i64: 1, 1, 2, 128>}]} {
    %c0 = arith.constant 0 : index
    %c0_0 = arith.constant 0 : index
    %c0_1 = arith.constant 0 : index
    %0 = vector.load %arg3[%c0, %c0_0, %c0_1] : memref<1x8x48xf32, #tpu.memory_space<vmem>>, vector<1x8x48xf32>
    %1 = vector.shape_cast %0 : vector<1x8x48xf32> to vector<8x48xf32>
    %c0_2 = arith.constant 0 : index
    %c0_3 = arith.constant 0 : index
    %2 = vector.load %arg11[%c0_2, %c0_3] : memref<48x48xf32, #tpu.memory_space<vmem>>, vector<8x48xf32>
    tpu.vector_store %arg11[%c0_2, %c0_3], %1 {strides = array<i32>} : memref<48x48xf32, #tpu.memory_space<vmem>>, vector<8x48xf32>,
    %c0_4 = arith.constant 0 : index
    %c0_5 = arith.constant 0 : index
    %c0_6 = arith.constant 0 : index
    %3 = vector.load %arg2[%c0_4, %c0_5, %c0_6] : memref<1x32x48xf32, #tpu.memory_space<vmem>>, vector<1x32x48xf32>
    %4 = vector.shape_cast %3 : vector<1x32x48xf32> to vector<32x48xf32>
    %c8 = arith.constant 8 : index
    %c0_7 = arith.constant 0 : index
    %5 = vector.load %arg11[%c8, %c0_7] : memref<48x48xf32, #tpu.memory_space<vmem>>, vector<32x48xf32>
    tpu.vector_store %arg11[%c8, %c0_7], %4 {strides = array<i32>} : memref<48x48xf32, #tpu.memory_space<vmem>>, vector<32x48xf32>,
    %c0_8 = arith.constant 0 : index
    %c0_9 = arith.constant 0 : index
    %c0_10 = arith.constant 0 : index
    %6 = vector.load %arg4[%c0_8, %c0_9, %c0_10] : memref<1x8x48xf32, #tpu.memory_space<vmem>>, vector<1x8x48xf32>
    %7 = vector.shape_cast %6 : vector<1x8x48xf32> to vector<8x48xf32>
    %c40 = arith.constant 40 : index
    %c0_11 = arith.constant 0 : index
    %8 = vector.load %arg11[%c40, %c0_11] : memref<48x48xf32, #tpu.memory_space<vmem>>, vector<8x48xf32>
    tpu.vector_store %arg11[%c40, %c0_11], %7 {strides = array<i32>} : memref<48x48xf32, #tpu.memory_space<vmem>>, vector<8x48xf32>,
    %c0_12 = arith.constant 0 : index
    %c0_13 = arith.constant 0 : index
    %9 = vector.load %arg11[%c0_12, %c0_13] : memref<48x48xf32, #tpu.memory_space<vmem>>, vector<48x48xf32>
    %c0_14 = arith.constant 0 : index
    %c0_15 = arith.constant 0 : index
    %10 = vector.load %arg5[%c0_14, %c0_15] : memref<48x256xf32, #tpu.memory_space<vmem>>, vector<48x256xf32>
    %cst = arith.constant dense<0.000000e+00> : vector<48x256xf32>
    %11 = tpu.matmul %9, %10, %cst {dimension_numbers = #tpu.dot_dimension_numbers<[1], [0], [0], [1], [0, 0, 1, 1], [], []>} : vector<48x48xf32>, vector<48x256xf32>, vector<48x256xf32> -> vector<48x256xf32>
    %c0_16 = arith.constant 0 : index
    %c0_17 = arith.constant 0 : index
    %12 = vector.load %arg6[%c0_16, %c0_17] : memref<1x256xf32, #tpu.memory_space<vmem>>, vector<1x256xf32>
    %13 = vector.broadcast %12 : vector<1x256xf32> to vector<48x256xf32>
    %14 = arith.addf %11, %13 : vector<48x256xf32>
    %15 = vector.extract_strided_slice %14 {offsets = [0, 0], sizes = [48, 128], strides = [1, 1]} : vector<48x256xf32> to vector<48x128xf32>
    %16 = vector.extract_strided_slice %14 {offsets = [0, 128], sizes = [48, 128], strides = [1, 1]} : vector<48x256xf32> to vector<48x128xf32>
    %17 = arith.negf %16 : vector<48x128xf32>
    %18 = math.exp %17 : vector<48x128xf32>
    %cst_18 = arith.constant 1.000000e+00 : f32
    %19 = vector.broadcast %cst_18 : f32 to vector<48x128xf32>
    %20 = arith.addf %19, %18 : vector<48x128xf32>
    %21 = arith.divf %19, %20 : vector<48x128xf32>
    %22 = arith.mulf %15, %21 : vector<48x128xf32>
    %23 = tpu.iota {dimensions = array<i32: 0>} : vector<48x1xi32>
    %c0_i32 = arith.constant 0 : i32
    %24 = arith.cmpi eq, %arg1, %c0_i32 : i32
    %c8_i32 = arith.constant 8 : i32
    %25 = vector.broadcast %c8_i32 : i32 to vector<48x1xi32>
    %26 = arith.cmpi slt, %23, %25 : vector<48x1xi32>
    %27 = vector.broadcast %24 : i1 to vector<48x1xi1>
    %28 = arith.andi %27, %26 : vector<48x1xi1>
    %c3_i32 = arith.constant 3 : i32
    %29 = arith.cmpi eq, %arg1, %c3_i32 : i32
    %c40_i32 = arith.constant 40 : i32
    %30 = vector.broadcast %c40_i32 : i32 to vector<48x1xi32>
    %31 = arith.cmpi sge, %23, %30 : vector<48x1xi32>
    %32 = vector.broadcast %29 : i1 to vector<48x1xi1>
    %33 = arith.andi %32, %31 : vector<48x1xi1>
    %34 = arith.ori %28, %33 : vector<48x1xi1>
    %cst_19 = arith.constant 0.000000e+00 : f32
    %35 = vector.shape_cast %34 : vector<48x1xi1> to vector<48x1xi1>
    %36 = vector.broadcast %35 : vector<48x1xi1> to vector<48x128xi1>
    %37 = vector.broadcast %cst_19 : f32 to vector<48x128xf32>
    %38 = arith.select %36, %37, %22 : vector<48x128xi1>, vector<48x128xf32>
    %c0_20 = arith.constant 0 : index
    %c0_21 = arith.constant 0 : index
    %39 = vector.load %arg7[%c0_20, %c0_21] : memref<7x128xf32, #tpu.memory_space<vmem>>, vector<7x128xf32>
    %40 = vector.extract_strided_slice %38 {offsets = [5, 0], sizes = [32, 128], strides = [1, 1]} : vector<48x128xf32> to vector<32x128xf32>
    %41 = vector.extract_strided_slice %39 {offsets = [0, 0], sizes = [1, 128], strides = [1, 1]} : vector<7x128xf32> to vector<1x128xf32>
    %42 = vector.broadcast %41 : vector<1x128xf32> to vector<32x128xf32>
    %43 = arith.mulf %40, %42 : vector<32x128xf32>
    %44 = vector.extract_strided_slice %38 {offsets = [6, 0], sizes = [32, 128], strides = [1, 1]} : vector<48x128xf32> to vector<32x128xf32>
    %45 = vector.extract_strided_slice %39 {offsets = [1, 0], sizes = [1, 128], strides = [1, 1]} : vector<7x128xf32> to vector<1x128xf32>
    %46 = vector.broadcast %45 : vector<1x128xf32> to vector<32x128xf32>
    %47 = arith.mulf %44, %46 : vector<32x128xf32>
    %48 = arith.addf %43, %47 : vector<32x128xf32>
    %49 = vector.extract_strided_slice %38 {offsets = [7, 0], sizes = [32, 128], strides = [1, 1]} : vector<48x128xf32> to vector<32x128xf32>
    %50 = vector.extract_strided_slice %39 {offsets = [2, 0], sizes = [1, 128], strides = [1, 1]} : vector<7x128xf32> to vector<1x128xf32>
    %51 = vector.broadcast %50 : vector<1x128xf32> to vector<32x128xf32>
    %52 = arith.mulf %49, %51 : vector<32x128xf32>
    %53 = arith.addf %48, %52 : vector<32x128xf32>
    %54 = vector.extract_strided_slice %38 {offsets = [8, 0], sizes = [32, 128], strides = [1, 1]} : vector<48x128xf32> to vector<32x128xf32>
    %55 = vector.extract_strided_slice %39 {offsets = [3, 0], sizes = [1, 128], strides = [1, 1]} : vector<7x128xf32> to vector<1x128xf32>
    %56 = vector.broadcast %55 : vector<1x128xf32> to vector<32x128xf32>
    %57 = arith.mulf %54, %56 : vector<32x128xf32>
    %58 = arith.addf %53, %57 : vector<32x128xf32>
    %59 = vector.extract_strided_slice %38 {offsets = [9, 0], sizes = [32, 128], strides = [1, 1]} : vector<48x128xf32> to vector<32x128xf32>
    %60 = vector.extract_strided_slice %39 {offsets = [4, 0], sizes = [1, 128], strides = [1, 1]} : vector<7x128xf32> to vector<1x128xf32>
    %61 = vector.broadcast %60 : vector<1x128xf32> to vector<32x128xf32>
    %62 = arith.mulf %59, %61 : vector<32x128xf32>
    %63 = arith.addf %58, %62 : vector<32x128xf32>
    %64 = vector.extract_strided_slice %38 {offsets = [10, 0], sizes = [32, 128], strides = [1, 1]} : vector<48x128xf32> to vector<32x128xf32>
    %65 = vector.extract_strided_slice %39 {offsets = [5, 0], sizes = [1, 128], strides = [1, 1]} : vector<7x128xf32> to vector<1x128xf32>
    %66 = vector.broadcast %65 : vector<1x128xf32> to vector<32x128xf32>
    %67 = arith.mulf %64, %66 : vector<32x128xf32>
    %68 = arith.addf %63, %67 : vector<32x128xf32>
    %69 = vector.extract_strided_slice %38 {offsets = [11, 0], sizes = [32, 128], strides = [1, 1]} : vector<48x128xf32> to vector<32x128xf32>
    %70 = vector.extract_strided_slice %39 {offsets = [6, 0], sizes = [1, 128], strides = [1, 1]} : vector<7x128xf32> to vector<1x128xf32>
    %71 = vector.broadcast %70 : vector<1x128xf32> to vector<32x128xf32>
    %72 = arith.mulf %69, %71 : vector<32x128xf32>
    %73 = arith.addf %68, %72 : vector<32x128xf32>
    %c0_22 = arith.constant 0 : index
    %c0_23 = arith.constant 0 : index
    %74 = vector.load %arg8[%c0_22, %c0_23] : memref<1x128xf32, #tpu.memory_space<vmem>>, vector<1x128xf32>
    %75 = vector.broadcast %74 : vector<1x128xf32> to vector<32x128xf32>
    %76 = arith.addf %73, %75 : vector<32x128xf32>
    %c0_24 = arith.constant 0 : index
    %c0_25 = arith.constant 0 : index
    %c0_26 = arith.constant 0 : index
    %77 = vector.load %arg9[%c0_24, %c0_25, %c0_26] : memref<1x32x128xf32, #tpu.memory_space<vmem>>, vector<1x32x128xf32>
    %78 = vector.shape_cast %77 : vector<1x32x128xf32> to vector<32x128xf32>
    %79 = vector.shape_cast %76 : vector<32x128xf32> to vector<1x32x128xf32>
    tpu.vector_store %arg9[%c0_24, %c0_25, %c0_26], %79 {strides = array<i32>} : memref<1x32x128xf32, #tpu.memory_space<vmem>>, vector<1x32x128xf32>,
    %cst_27 = arith.constant dense<0.000000e+00> : vector<128xf32>
    %80 = vector.multi_reduction <add>, %76, %cst_27 [0] : vector<32x128xf32> to vector<128xf32>
    %81 = vector.shape_cast %80 : vector<128xf32> to vector<1x128xf32>
    %c0_28 = arith.constant 0 : index
    %c0_29 = arith.constant 0 : index
    %c0_30 = arith.constant 0 : index
    %c0_31 = arith.constant 0 : index
    %82 = vector.load %arg10[%c0_28, %c0_29, %c0_30, %c0_31] : memref<1x1x2x128xf32, #tpu.memory_space<vmem>>, vector<1x1x1x128xf32>
    %83 = vector.shape_cast %82 : vector<1x1x1x128xf32> to vector<1x128xf32>
    %84 = vector.shape_cast %81 : vector<1x128xf32> to vector<1x1x1x128xf32>
    tpu.vector_store %arg10[%c0_28, %c0_29, %c0_30, %c0_31], %84 {strides = array<i32>} : memref<1x1x2x128xf32, #tpu.memory_space<vmem>>, vector<1x1x1x128xf32>,
    %85 = arith.mulf %76, %76 : vector<32x128xf32>
    %cst_32 = arith.constant dense<0.000000e+00> : vector<128xf32>
    %86 = vector.multi_reduction <add>, %85, %cst_32 [0] : vector<32x128xf32> to vector<128xf32>
    %87 = vector.shape_cast %86 : vector<128xf32> to vector<1x128xf32>
    %c0_33 = arith.constant 0 : index
    %c0_34 = arith.constant 0 : index
    %c1 = arith.constant 1 : index
    %c0_35 = arith.constant 0 : index
    %88 = vector.load %arg10[%c0_33, %c0_34, %c1, %c0_35] : memref<1x1x2x128xf32, #tpu.memory_space<vmem>>, vector<1x1x1x128xf32>
    %89 = vector.shape_cast %88 : vector<1x1x1x128xf32> to vector<1x128xf32>
    %90 = vector.shape_cast %87 : vector<1x128xf32> to vector<1x1x1x128xf32>
    tpu.vector_store %arg10[%c0_33, %c0_34, %c1, %c0_35], %90 {strides = array<i32>} : memref<1x1x2x128xf32, #tpu.memory_space<vmem>>, vector<1x1x1x128xf32>,
    return
  }
  func.func @transform_0(%arg0: i32, %arg1: i32) -> (i32, i32, i32) {
    %c0_i32 = arith.constant 0 : i32
    %c0_i32_0 = arith.constant 0 : i32
    return %arg0, %arg1, %c0_i32 : i32, i32, i32
  }
  func.func @transform_1(%arg0: i32, %arg1: i32) -> (i32, i32, i32) {
    %c4_i32 = arith.constant 4 : i32
    %0 = arith.muli %arg1, %c4_i32 : i32
    %c1_i32 = arith.constant 1 : i32
    %1 = arith.subi %0, %c1_i32 : i32
    %c0_i32 = arith.constant 0 : i32
    %2 = arith.maxsi %1, %c0_i32 : i32
    %c0_i32_0 = arith.constant 0 : i32
    %c0_i32_1 = arith.constant 0 : i32
    return %arg0, %2, %c0_i32_0 : i32, i32, i32
  }
  func.func @transform_2(%arg0: i32, %arg1: i32) -> (i32, i32, i32) {
    %c1_i32 = arith.constant 1 : i32
    %0 = arith.addi %arg1, %c1_i32 : i32
    %c4_i32 = arith.constant 4 : i32
    %1 = arith.muli %0, %c4_i32 : i32
    %c15_i32 = arith.constant 15 : i32
    %2 = arith.minsi %1, %c15_i32 : i32
    %c0_i32 = arith.constant 0 : i32
    %c0_i32_0 = arith.constant 0 : i32
    return %arg0, %2, %c0_i32 : i32, i32, i32
  }
  func.func @transform_3(%arg0: i32, %arg1: i32) -> (i32, i32) {
    %c0_i32 = arith.constant 0 : i32
    %c0_i32_0 = arith.constant 0 : i32
    %c0_i32_1 = arith.constant 0 : i32
    return %c0_i32, %c0_i32_0 : i32, i32
  }
  func.func @transform_4(%arg0: i32, %arg1: i32) -> (i32, i32) {
    %c0_i32 = arith.constant 0 : i32
    %c0_i32_0 = arith.constant 0 : i32
    %c0_i32_1 = arith.constant 0 : i32
    return %c0_i32, %c0_i32_0 : i32, i32
  }
  func.func @transform_5(%arg0: i32, %arg1: i32) -> (i32, i32) {
    %c0_i32 = arith.constant 0 : i32
    %c0_i32_0 = arith.constant 0 : i32
    %c0_i32_1 = arith.constant 0 : i32
    return %c0_i32, %c0_i32_0 : i32, i32
  }
  func.func @transform_6(%arg0: i32, %arg1: i32) -> (i32, i32) {
    %c0_i32 = arith.constant 0 : i32
    %c0_i32_0 = arith.constant 0 : i32
    %c0_i32_1 = arith.constant 0 : i32
    return %c0_i32, %c0_i32_0 : i32, i32
  }
  func.func @transform_7(%arg0: i32, %arg1: i32) -> (i32, i32, i32) {
    %c0_i32 = arith.constant 0 : i32
    %c0_i32_0 = arith.constant 0 : i32
    return %arg0, %arg1, %c0_i32 : i32, i32, i32
  }
  func.func @transform_8(%arg0: i32, %arg1: i32) -> (i32, i32, i32, i32) {
    %c0_i32 = arith.constant 0 : i32
    %c0_i32_0 = arith.constant 0 : i32
    %c0_i32_1 = arith.constant 0 : i32
    return %arg0, %arg1, %c0_i32, %c0_i32_0 : i32, i32, i32, i32
  }
}

</mosaic_0001>

<llo_original>
// kernel: tpu_custom_call.1
$region0: #{tpu_custom_call.1}
  #allocation0 [shape = 'u32[]', space=smem, size = 0x4, offset = 0x4, fixed_abs, tag = 'smem constant byte address 0x4 - core index']
  #allocation1 [shape = 'u32[144,128]{1,0:T(1,128)}', space=vmem, size = 0x12000, scoped, tag = 'internal scratch']
  #allocation2 [shape = 'f32[48,48]{1,0:T(8,128)}', space=vmem, size = 0x6000, scoped, tag = 'scratch operand']
  %s0 = inlined_call_operand.vmem [shape: f32[2,128,48], index: 0, kind: input, shape index: {}]
  %s1 = inlined_call_operand.vmem [shape: f32[2,128,48], index: 1, kind: input, shape index: {}]
  %s2 = inlined_call_operand.vmem [shape: f32[2,128,48], index: 2, kind: input, shape index: {}]
  %s3 = inlined_call_operand.vmem [shape: f32[48,256], index: 3, kind: input, shape index: {}]
  %s4 = inlined_call_operand.vmem [shape: f32[1,256], index: 4, kind: input, shape index: {}]
  %s5 = inlined_call_operand.vmem [shape: f32[7,128], index: 5, kind: input, shape index: {}]
  %s6 = inlined_call_operand.vmem [shape: f32[1,128], index: 6, kind: input, shape index: {}]
  %s7 = inlined_call_operand.hbm [shape: f32[2,128,128], index: 7, kind: output, shape index: {0}]
  %s8 = inlined_call_operand.hbm [shape: f32[2,4,2,128], index: 8, kind: output, shape index: {1}]
  %9 = xla_tuple %s7, %s8
  %s10 = sld [smem:[#allocation0]]
  $region69: #{tpu_custom_call.1} parent=0
    _
  %s12 = ssub.s32 1, %s10
  %s13 = scalar_select 0, %s12, %s10
  $region1: #{tpu_custom_call.1} parent=0
    #allocation3 [shape = 'u8[32768]{0}', space=vmem, size = 0x8000, scoped, tag = 'output window, operand 0']
    #allocation4 [shape = 's32[2]{0}', space=sflag, size = 0x8, scoped, tag = 'scoped memory for tpu_custom_call.1']
    #allocation5 [shape = 'u8[2048]{0}', space=vmem, size = 0x800, scoped, tag = 'output window, operand 1']
    #allocation6 [shape = 's32[2]{0}', space=sflag, size = 0x8, scoped, tag = 'scoped memory for tpu_custom_call.1']
    %14 = vsyncpa [#allocation4], 0
    %s15 = scalar_lea.sflag [#allocation4], 1
    %16 = vsyncpa %s15, 0
    %17 = vsyncpa [#allocation6], 0
    %s18 = scalar_lea.sflag [#allocation6], 1
    %19 = vsyncpa %s18, 0
    loop: start=0, step=1, limit=10
    $region2: #{tpu_custom_call.1} parent=1 // loop_pre_header
      _
    $region3: #{tpu_custom_call.1} parent=1 // loop_header
      %s21 = sphi 0, %s25
      %p22 = scmp.ge.s32.totalorder %s21, 10
      %s28 = sphi 0, %s40
      %s29 = sphi 0, %s36
      %s30 = sphi 0, %s28
      %s31 = sphi 0, %s29
      %s32 = sphi 0, %s30
      %s33 = sphi 0, %s31
      %s45 = sphi 0, %s47
      %s48 = sphi 0, %s45
      %s49 = sphi 0, %s48
      %s65 = sphi 0, %s49
      %s81 = sphi 0, %s83
      %s84 = sphi 0, %s81
      %s85 = sphi 0, %s84
      %s101 = sphi 0, %s85
      %s117 = sphi 0, %s119
      %s120 = sphi 0, %s117
      %s121 = sphi 0, %s120
      %s137 = sphi 0, %s121
      %s141 = sphi 0, %s141
      %s143 = sphi 0, %s141
      %s144 = sphi 0, %s143
      %s158 = sphi 0, %s144
      %s162 = sphi 0, %s162
      %s164 = sphi 0, %s162
      %s165 = sphi 0, %s164
      %s179 = sphi 0, %s165
      %s183 = sphi 0, %s183
      %s185 = sphi 0, %s183
      %s186 = sphi 0, %s185
      %s200 = sphi 0, %s186
      %s204 = sphi 0, %s204
      %s206 = sphi 0, %s204
      %s207 = sphi 0, %s206
      %s221 = sphi 0, %s207
      %s229 = sphi 0, %s231
      %s232 = sphi 0, %s229
      %s233 = sphi 0, %s232
      %s249 = sphi 0, %s233
      %s257 = sphi 0, %s259
      %s260 = sphi 0, %s257
      %s261 = sphi 0, %s260
      %s277 = sphi 0, %s261
    $region4: #{tpu_custom_call.1} parent=1 // loop_header_branch
      %24 = sbr.rel (%p22) target = $region8
    $region5: #{tpu_custom_call.1} parent=1 // loop_body
      %s26 = ssub.s32 %s21, 1
      %s27 = ssub.s32 %s21, 2
      %s34 = sadd.s32 1, %s29
      %p35 = scmp.ge.s32.totalorder %s34, 4
      %s36 = scalar_select %p35, 0, %s34
      %s37 = sadd.s32 1, %s28
      %s38 = scalar_select %p35, %s37, %s28
      %p39 = scmp.ge.s32.totalorder %s38, 2
      %s40 = scalar_select %p39, 0, %s38
      %s41 = ssub.s32 %s28, %s40
      %s42 = ssub.s32 %s29, %s36
      %s43 = sor.u32 %s41, %s42
      %p44 = scmp.eq.s32.totalorder %s43, 0
      %s46 = sadd.s32 %s45, 1
      %s47 = scalar_select %p44, %s45, %s46
      %p50 = pneg %p44
      %p51 = scmp.eq.s32.totalorder %s21, 7
      %p52 = por %p50, %p51
      %p53 = scmp.ne.s32.totalorder %s45, %s48
      %p54 = scmp.eq.s32.totalorder %s21, 0
      %p55 = por %p53, %p54
      %p56 = scmp.ne.s32.totalorder %s45, %s48
      %p57 = scmp.eq.s32.totalorder %s26, 7
      %p58 = por %p56, %p57
      %p59 = scmp.ne.s32.totalorder %s48, %s49
      %p60 = scmp.eq.s32.totalorder %s26, 0
      %p61 = por %p59, %p60
      %p62 = scmp.ne.s32.totalorder %s48, %s49
      %p63 = scmp.eq.s32.totalorder %s27, 7
      %p64 = por %p62, %p63
      %p66 = scmp.ne.s32.totalorder %s49, %s65
      %p67 = scmp.eq.s32.totalorder %s27, 0
      %p68 = por %p66, %p67
      %s69 = smul.u32 %s29, 4
      %s70 = ssub.s32 %s69, 1
      %p71 = scmp.gt.s32.totalorder %s70, 0
      %s72 = scalar_select %p71, %s70, 0
      %s73 = smul.u32 %s36, 4
      %s74 = ssub.s32 %s73, 1
      %p75 = scmp.gt.s32.totalorder %s74, 0
      %s76 = scalar_select %p75, %s74, 0
      %s77 = ssub.s32 %s28, %s40
      %s78 = ssub.s32 %s72, %s76
      %s79 = sor.u32 %s77, %s78
      %p80 = scmp.eq.s32.totalorder %s79, 0
      %s82 = sadd.s32 %s81, 1
      %s83 = scalar_select %p80, %s81, %s82
      %p86 = pneg %p80
      %p87 = scmp.eq.s32.totalorder %s21, 7
      %p88 = por %p86, %p87
      %p89 = scmp.ne.s32.totalorder %s81, %s84
      %p90 = scmp.eq.s32.totalorder %s21, 0
      %p91 = por %p89, %p90
      %p92 = scmp.ne.s32.totalorder %s81, %s84
      %p93 = scmp.eq.s32.totalorder %s26, 7
      %p94 = por %p92, %p93
      %p95 = scmp.ne.s32.totalorder %s84, %s85
      %p96 = scmp.eq.s32.totalorder %s26, 0
      %p97 = por %p95, %p96
      %p98 = scmp.ne.s32.totalorder %s84, %s85
      %p99 = scmp.eq.s32.totalorder %s27, 7
      %p100 = por %p98, %p99
      %p102 = scmp.ne.s32.totalorder %s85, %s101
      %p103 = scmp.eq.s32.totalorder %s27, 0
      %p104 = por %p102, %p103
      %s105 = sadd.s32 %s29, 1
      %s106 = smul.u32 %s105, 4
      %p107 = scmp.lt.s32.totalorder %s106, 15
      %s108 = scalar_select %p107, %s106, 15
      %s109 = sadd.s32 %s36, 1
      %s110 = smul.u32 %s109, 4
      %p111 = scmp.lt.s32.totalorder %s110, 15
      %s112 = scalar_select %p111, %s110, 15
      %s113 = ssub.s32 %s28, %s40
      %s114 = ssub.s32 %s108, %s112
      %s115 = sor.u32 %s113, %s114
      %p116 = scmp.eq.s32.totalorder %s115, 0
      %s118 = sadd.s32 %s117, 1
      %s119 = scalar_select %p116, %s117, %s118
      %p122 = pneg %p116
      %p123 = scmp.eq.s32.totalorder %s21, 7
      %p124 = por %p122, %p123
      %p125 = scmp.ne.s32.totalorder %s117, %s120
      %p126 = scmp.eq.s32.totalorder %s21, 0
      %p127 = por %p125, %p126
      %p128 = scmp.ne.s32.totalorder %s117, %s120
      %p129 = scmp.eq.s32.totalorder %s26, 7
      %p130 = por %p128, %p129
      %p131 = scmp.ne.s32.totalorder %s120, %s121
      %p132 = scmp.eq.s32.totalorder %s26, 0
      %p133 = por %p131, %p132
      %p134 = scmp.ne.s32.totalorder %s120, %s121
      %p135 = scmp.eq.s32.totalorder %s27, 7
      %p136 = por %p134, %p135
      %p138 = scmp.ne.s32.totalorder %s121, %s137
      %p139 = scmp.eq.s32.totalorder %s27, 0
      %p140 = por %p138, %p139
      %s142 = sadd.s32 %s141, 1
      %p145 = scmp.eq.s32.totalorder %s21, 7
      %p146 = scmp.ne.s32.totalorder %s141, %s143
      %p147 = scmp.eq.s32.totalorder %s21, 0
      %p148 = por %p146, %p147
      %p149 = scmp.ne.s32.totalorder %s141, %s143
      %p150 = scmp.eq.s32.totalorder %s26, 7
      %p151 = por %p149, %p150
      %p152 = scmp.ne.s32.totalorder %s143, %s144
      %p153 = scmp.eq.s32.totalorder %s26, 0
      %p154 = por %p152, %p153
      %p155 = scmp.ne.s32.totalorder %s143, %s144
      %p156 = scmp.eq.s32.totalorder %s27, 7
      %p157 = por %p155, %p156
      %p159 = scmp.ne.s32.totalorder %s144, %s158
      %p160 = scmp.eq.s32.totalorder %s27, 0
      %p161 = por %p159, %p160
      %s163 = sadd.s32 %s162, 1
      %p166 = scmp.eq.s32.totalorder %s21, 7
      %p167 = scmp.ne.s32.totalorder %s162, %s164
      %p168 = scmp.eq.s32.totalorder %s21, 0
      %p169 = por %p167, %p168
      %p170 = scmp.ne.s32.totalorder %s162, %s164
      %p171 = scmp.eq.s32.totalorder %s26, 7
      %p172 = por %p170, %p171
      %p173 = scmp.ne.s32.totalorder %s164, %s165
      %p174 = scmp.eq.s32.totalorder %s26, 0
      %p175 = por %p173, %p174
      %p176 = scmp.ne.s32.totalorder %s164, %s165
      %p177 = scmp.eq.s32.totalorder %s27, 7
      %p178 = por %p176, %p177
      %p180 = scmp.ne.s32.totalorder %s165, %s179
      %p181 = scmp.eq.s32.totalorder %s27, 0
      %p182 = por %p180, %p181
      %s184 = sadd.s32 %s183, 1
      %p187 = scmp.eq.s32.totalorder %s21, 7
      %p188 = scmp.ne.s32.totalorder %s183, %s185
      %p189 = scmp.eq.s32.totalorder %s21, 0
      %p190 = por %p188, %p189
      %p191 = scmp.ne.s32.totalorder %s183, %s185
      %p192 = scmp.eq.s32.totalorder %s26, 7
      %p193 = por %p191, %p192
      %p194 = scmp.ne.s32.totalorder %s185, %s186
      %p195 = scmp.eq.s32.totalorder %s26, 0
      %p196 = por %p194, %p195
      %p197 = scmp.ne.s32.totalorder %s185, %s186
      %p198 = scmp.eq.s32.totalorder %s27, 7
      %p199 = por %p197, %p198
      %p201 = scmp.ne.s32.totalorder %s186, %s200
      %p202 = scmp.eq.s32.totalorder %s27, 0
      %p203 = por %p201, %p202
      %s205 = sadd.s32 %s204, 1
      %p208 = scmp.eq.s32.totalorder %s21, 7
      %p209 = scmp.ne.s32.totalorder %s204, %s206
      %p210 = scmp.eq.s32.totalorder %s21, 0
      %p211 = por %p209, %p210
      %p212 = scmp.ne.s32.totalorder %s204, %s206
      %p213 = scmp.eq.s32.totalorder %s26, 7
      %p214 = por %p212, %p213
      %p215 = scmp.ne.s32.totalorder %s206, %s207
      %p216 = scmp.eq.s32.totalorder %s26, 0
      %p217 = por %p215, %p216
      %p218 = scmp.ne.s32.totalorder %s206, %s207
      %p219 = scmp.eq.s32.totalorder %s27, 7
      %p220 = por %p218, %p219
      %p222 = scmp.ne.s32.totalorder %s207, %s221
      %p223 = scmp.eq.s32.totalorder %s27, 0
      %p224 = por %p222, %p223
      %s225 = ssub.s32 %s28, %s40
      %s226 = ssub.s32 %s29, %s36
      %s227 = sor.u32 %s225, %s226
      %p228 = scmp.eq.s32.totalorder %s227, 0
      %s230 = sadd.s32 %s229, 1
      %s231 = scalar_select %p228, %s229, %s230
      %p234 = pneg %p228
      %p235 = scmp.eq.s32.totalorder %s21, 7
      %p236 = por %p234, %p235
      %p237 = scmp.ne.s32.totalorder %s229, %s232
      %p238 = scmp.eq.s32.totalorder %s21, 0
      %p239 = por %p237, %p238
      %p240 = scmp.ne.s32.totalorder %s229, %s232
      %p241 = scmp.eq.s32.totalorder %s26, 7
      %p242 = por %p240, %p241
      %p243 = scmp.ne.s32.totalorder %s232, %s233
      %p244 = scmp.eq.s32.totalorder %s26, 0
      %p245 = por %p243, %p244
      %p246 = scmp.ne.s32.totalorder %s232, %s233
      %p247 = scmp.eq.s32.totalorder %s27, 7
      %p248 = por %p246, %p247
      %p250 = scmp.ne.s32.totalorder %s233, %s249
      %p251 = scmp.eq.s32.totalorder %s27, 0
      %p252 = por %p250, %p251
      %s253 = ssub.s32 %s28, %s40
      %s254 = ssub.s32 %s29, %s36
      %s255 = sor.u32 %s253, %s254
      %p256 = scmp.eq.s32.totalorder %s255, 0
      %s258 = sadd.s32 %s257, 1
      %s259 = scalar_select %p256, %s257, %s258
      %p262 = pneg %p256
      %p263 = scmp.eq.s32.totalorder %s21, 7
      %p264 = por %p262, %p263
      %p265 = scmp.ne.s32.totalorder %s257, %s260
      %p266 = scmp.eq.s32.totalorder %s21, 0
      %p267 = por %p265, %p266
      %p268 = scmp.ne.s32.totalorder %s257, %s260
      %p269 = scmp.eq.s32.totalorder %s26, 7
      %p270 = por %p268, %p269
      %p271 = scmp.ne.s32.totalorder %s260, %s261
      %p272 = scmp.eq.s32.totalorder %s26, 0
      %p273 = por %p271, %p272
      %p274 = scmp.ne.s32.totalorder %s260, %s261
      %p275 = scmp.eq.s32.totalorder %s27, 7
      %p276 = por %p274, %p275
      %p278 = scmp.ne.s32.totalorder %s261, %s277
      %p279 = scmp.eq.s32.totalorder %s27, 0
      %p280 = por %p278, %p279
      %p281 = scmp.le.s32.totalorder 1, %s21
      %p282 = scmp.lt.s32.totalorder %s21, 9
      %p283 = pnand %p281, %p282
      %p284 = pneg %p283
      // Predicated region
      $region9: #{tpu_custom_call.1} parent=5 // pred_check
        _
      $region10: #{tpu_custom_call.1} parent=5 // pred_check_branch
        %286 = sbr.rel (%p283) target = $region12
      $region11: #{tpu_custom_call.1} parent=5 // pred_region
        %s287 = ssub.s32 %s21, 1
        // Predicated region
        $region13: #{tpu_custom_call.1} parent=11 // pred_check
          %p288 = pneg %p154
        $region14: #{tpu_custom_call.1} parent=11 // pred_check_branch
          %290 = sbr.rel (%p288) target = $region16
        $region15: #{tpu_custom_call.1} parent=11 // pred_region
          _
        $region16: #{tpu_custom_call.1} parent=11 // pred_fallthru
          _
        // Predicated region
        $region17: #{tpu_custom_call.1} parent=11 // pred_check
          %p291 = pneg %p175
        $region18: #{tpu_custom_call.1} parent=11 // pred_check_branch
          %293 = sbr.rel (%p291) target = $region20
        $region19: #{tpu_custom_call.1} parent=11 // pred_region
          _
        $region20: #{tpu_custom_call.1} parent=11 // pred_fallthru
          _
        // Predicated region
        $region21: #{tpu_custom_call.1} parent=11 // pred_check
          %p294 = pneg %p196
        $region22: #{tpu_custom_call.1} parent=11 // pred_check_branch
          %296 = sbr.rel (%p294) target = $region24
        $region23: #{tpu_custom_call.1} parent=11 // pred_region
          _
        $region24: #{tpu_custom_call.1} parent=11 // pred_fallthru
          _
        // Predicated region
        $region25: #{tpu_custom_call.1} parent=11 // pred_check
          %p297 = pneg %p217
        $region26: #{tpu_custom_call.1} parent=11 // pred_check_branch
          %299 = sbr.rel (%p297) target = $region28
        $region27: #{tpu_custom_call.1} parent=11 // pred_region
          _
        $region28: #{tpu_custom_call.1} parent=11 // pred_fallthru
          _
      $region12: #{tpu_custom_call.1} parent=5 // pred_fallthru
        _
      %p300 = scmp.lt.s32.totalorder %s21, 8
      // Predicated region
      $region29: #{tpu_custom_call.1} parent=5 // pred_check
        %p301 = pneg %p300
      $region30: #{tpu_custom_call.1} parent=5 // pred_check_branch
        %303 = sbr.rel (%p301) target = $region32
      $region31: #{tpu_custom_call.1} parent=5 // pred_region
        // Predicated region
        $region33: #{tpu_custom_call.1} parent=31 // pred_check
          %p304 = pneg %p55
        $region34: #{tpu_custom_call.1} parent=31 // pred_check_branch
          %306 = sbr.rel (%p304) target = $region36
        $region35: #{tpu_custom_call.1} parent=31 // pred_region
          %s307 = smul.u32 4, %s29
          %p308 = scmp.lt.s32.totalorder %s28, 1
          %s309 = scalar_select %p308, %s28, 1
          %p310 = scmp.lt.s32.totalorder %s307, 15
          %s311 = scalar_select %p310, %s307, 15
          %s312 = smul.addr %s309, 16
          %s313 = sadd.s32 %s311, %s312
          %s314 = smul.addr %s313, 8
          %s315 = scalar_lea.vmem %s0, %s314
          %s316 = smul.u32 4, %s29
        $region36: #{tpu_custom_call.1} parent=31 // pred_fallthru
          _
        // Predicated region
        $region37: #{tpu_custom_call.1} parent=31 // pred_check
          %p317 = pneg %p91
        $region38: #{tpu_custom_call.1} parent=31 // pred_check_branch
          %319 = sbr.rel (%p317) target = $region40
        $region39: #{tpu_custom_call.1} parent=31 // pred_region
          %s320 = smul.u32 %s29, 4
          %s321 = ssub.s32 %s320, 1
          %p322 = scmp.gt.s32.totalorder %s321, 0
          %s323 = scalar_select %p322, %s321, 0
          %p324 = scmp.lt.s32.totalorder %s28, 1
          %s325 = scalar_select %p324, %s28, 1
          %p326 = scmp.lt.s32.totalorder %s323, 15
          %s327 = scalar_select %p326, %s323, 15
          %s328 = smul.addr %s325, 16
          %s329 = sadd.s32 %s327, %s328
          %s330 = smul.addr %s329, 8
          %s331 = scalar_lea.vmem %s1, %s330
          %s332 = smul.u32 %s29, 4
          %s333 = ssub.s32 %s332, 1
          %p334 = scmp.gt.s32.totalorder %s333, 0
          %s335 = scalar_select %p334, %s333, 0
        $region40: #{tpu_custom_call.1} parent=31 // pred_fallthru
          _
        // Predicated region
        $region41: #{tpu_custom_call.1} parent=31 // pred_check
          %p336 = pneg %p127
        $region42: #{tpu_custom_call.1} parent=31 // pred_check_branch
          %338 = sbr.rel (%p336) target = $region44
        $region43: #{tpu_custom_call.1} parent=31 // pred_region
          %s339 = sadd.s32 %s29, 1
          %s340 = smul.u32 %s339, 4
          %p341 = scmp.lt.s32.totalorder %s340, 15
          %s342 = scalar_select %p341, %s340, 15
          %p343 = scmp.lt.s32.totalorder %s28, 1
          %s344 = scalar_select %p343, %s28, 1
          %p345 = scmp.lt.s32.totalorder %s342, 15
          %s346 = scalar_select %p345, %s342, 15
          %s347 = smul.addr %s344, 16
          %s348 = sadd.s32 %s346, %s347
          %s349 = smul.addr %s348, 8
          %s350 = scalar_lea.vmem %s2, %s349
          %s351 = sadd.s32 %s29, 1
          %s352 = smul.u32 %s351, 4
          %p353 = scmp.lt.s32.totalorder %s352, 15
          %s354 = scalar_select %p353, %s352, 15
        $region44: #{tpu_custom_call.1} parent=31 // pred_fallthru
          _
      $region32: #{tpu_custom_call.1} parent=5 // pred_fallthru
        _
      %p355 = scmp.le.s32.totalorder 1, %s21
      %p356 = scmp.lt.s32.totalorder %s21, 9
      %p357 = pnand %p355, %p356
      %p358 = pneg %p357
      // Predicated region
      $region45: #{tpu_custom_call.1} parent=5 // pred_check
        _
      $region46: #{tpu_custom_call.1} parent=5 // pred_check_branch
        %360 = sbr.rel (%p357) target = $region48
      $region47: #{tpu_custom_call.1} parent=5 // pred_region
        %s361 = ssub.s32 %s21, 1
        %s362 = smul.u32 4, %s31
        %p363 = scmp.lt.s32.totalorder %s30, 1
        %s364 = scalar_select %p363, %s30, 1
        %p365 = scmp.lt.s32.totalorder %s362, 15
        %s366 = scalar_select %p365, %s362, 15
        %s367 = smul.addr %s364, 16
        %s368 = sadd.s32 %s366, %s367
        %s369 = smul.addr %s368, 8
        %s370 = scalar_lea.vmem %s0, %s369
        %p371 = pneg %p61
        %p372 = pneg %p58
        %s373 = smul.u32 %s31, 4
        %s374 = ssub.s32 %s373, 1
        %p375 = scmp.gt.s32.totalorder %s374, 0
        %s376 = scalar_select %p375, %s374, 0
        %p377 = scmp.lt.s32.totalorder %s30, 1
        %s378 = scalar_select %p377, %s30, 1
        %p379 = scmp.lt.s32.totalorder %s376, 15
        %s380 = scalar_select %p379, %s376, 15
        %s381 = smul.addr %s378, 16
        %s382 = sadd.s32 %s380, %s381
        %s383 = smul.addr %s382, 8
        %s384 = scalar_lea.vmem %s1, %s383
        %p385 = pneg %p97
        %p386 = pneg %p94
        %s387 = sadd.s32 %s31, 1
        %s388 = smul.u32 %s387, 4
        %p389 = scmp.lt.s32.totalorder %s388, 15
        %s390 = scalar_select %p389, %s388, 15
        %p391 = scmp.lt.s32.totalorder %s30, 1
        %s392 = scalar_select %p391, %s30, 1
        %p393 = scmp.lt.s32.totalorder %s390, 15
        %s394 = scalar_select %p393, %s390, 15
        %s395 = smul.addr %s392, 16
        %s396 = sadd.s32 %s394, %s395
        %s397 = smul.addr %s396, 8
        %s398 = scalar_lea.vmem %s2, %s397
        %p399 = pneg %p133
        %p400 = pneg %p130
        %p401 = pneg %p154
        %p402 = pneg %p151
        %p403 = pneg %p175
        %p404 = pneg %p172
        %p405 = pneg %p196
        %p406 = pneg %p193
        %p407 = pneg %p217
        %p408 = pneg %p214
        %p409 = pneg %p245
        %p410 = pneg %p242
        %s411 = sand.u32 %s232, 1
        %s412 = scalar_lea.sflag [#allocation4], %s411
        %s413 = sand.u32 %s232, 1
        %s414 = smul.addr %s413, 32
        %s415 = scalar_lea.vmem [#allocation3], %s414
        %p416 = pneg %p273
        %p417 = pneg %p270
        %s418 = sand.u32 %s260, 1
        %s419 = scalar_lea.sflag [#allocation6], %s418
        %s420 = sand.u32 %s260, 1
        %s421 = smul.addr %s420, 2
        %s422 = scalar_lea.vmem [#allocation5], %s421
        %s423 = smul.u32 4, %s31
        %p424 = scmp.lt.s32.totalorder %s30, 1
        %s425 = scalar_select %p424, %s30, 1
        %p426 = scmp.lt.s32.totalorder %s423, 15
        %s427 = scalar_select %p426, %s423, 15
        %s428 = smul.addr %s425, 16
        %s429 = sadd.s32 %s427, %s428
        %s430 = smul.addr %s429, 8
        %s431 = scalar_lea.vmem %s0, %s430
        %s432 = smul.u32 4, %s31
        %s433 = smul.u32 %s31, 4
        %s434 = ssub.s32 %s433, 1
        %p435 = scmp.gt.s32.totalorder %s434, 0
        %s436 = scalar_select %p435, %s434, 0
        %p437 = scmp.lt.s32.totalorder %s30, 1
        %s438 = scalar_select %p437, %s30, 1
        %p439 = scmp.lt.s32.totalorder %s436, 15
        %s440 = scalar_select %p439, %s436, 15
        %s441 = smul.addr %s438, 16
        %s442 = sadd.s32 %s440, %s441
        %s443 = smul.addr %s442, 8
        %s444 = scalar_lea.vmem %s1, %s443
        %s445 = smul.u32 %s31, 4
        %s446 = ssub.s32 %s445, 1
        %p447 = scmp.gt.s32.totalorder %s446, 0
        %s448 = scalar_select %p447, %s446, 0
        %s449 = sadd.s32 %s31, 1
        %s450 = smul.u32 %s449, 4
        %p451 = scmp.lt.s32.totalorder %s450, 15
        %s452 = scalar_select %p451, %s450, 15
        %p453 = scmp.lt.s32.totalorder %s30, 1
        %s454 = scalar_select %p453, %s30, 1
        %p455 = scmp.lt.s32.totalorder %s452, 15
        %s456 = scalar_select %p455, %s452, 15
        %s457 = smul.addr %s454, 16
        %s458 = sadd.s32 %s456, %s457
        %s459 = smul.addr %s458, 8
        %s460 = scalar_lea.vmem %s2, %s459
        %s461 = sadd.s32 %s31, 1
        %s462 = smul.u32 %s461, 4
        %p463 = scmp.lt.s32.totalorder %s462, 15
        %s464 = scalar_select %p463, %s462, 15
        %s465 = smul.u32 4, %s31
        %v466 = vld [vmem:[%s444] sm:$0xff]
        %vm467 = vcmask 392192
        %468 = vst.msk [vmem:[#allocation2] sm:$0xff] %vm467, %v466
        %v469 = vld [vmem:[%s431] sm:$0xff]
        %v470 = vld [vmem:[%s431 + $0x8] sm:$0xff]
        %v471 = vld [vmem:[%s431 + $0x10] sm:$0xff]
        %v472 = vld [vmem:[%s431 + $0x18] sm:$0xff]
        %473 = vst.msk [vmem:[#allocation2 + $0x8] sm:$0xff] %vm467, %v469
        %474 = vst.msk [vmem:[#allocation2 + $0x10] sm:$0xff] %vm467, %v470
        %475 = vst.msk [vmem:[#allocation2 + $0x18] sm:$0xff] %vm467, %v471
        %476 = vst.msk [vmem:[#allocation2 + $0x20] sm:$0xff] %vm467, %v472
        %v477 = vld [vmem:[%s460] sm:$0xff]
        %478 = vst.msk [vmem:[#allocation2 + $0x28] sm:$0xff] %vm467, %v477
        %v479 = vld [vmem:[#allocation2] sm:$0xff]
        %v480 = vld [vmem:[#allocation2 + $0x8] sm:$0xff]
        %v481 = vld [vmem:[#allocation2 + $0x10] sm:$0xff]
        %v482 = vld [vmem:[#allocation2 + $0x18] sm:$0xff]
        %v483 = vld [vmem:[#allocation2 + $0x20] sm:$0xff]
        %v484 = vld [vmem:[#allocation2 + $0x28] sm:$0xff]
        %v485 = vld [vmem:[%s3] sm:$0xff]
        %v486 = vld [vmem:[%s3 + $0x8] sm:$0xff]
        %v487 = vld [vmem:[%s3 + $0x10] sm:$0xff]
        %v488 = vld [vmem:[%s3 + $0x18] sm:$0xff]
        %v489 = vld [vmem:[%s3 + $0x20] sm:$0xff]
        %v490 = vld [vmem:[%s3 + $0x28] sm:$0xff]
        %v491 = vld [vmem:[%s3 + $0x30] sm:$0xff]
        %v492 = vld [vmem:[%s3 + $0x38] sm:$0xff]
        %v493 = vld [vmem:[%s3 + $0x40] sm:$0xff]
        %v494 = vld [vmem:[%s3 + $0x48] sm:$0xff]
        %v495 = vld [vmem:[%s3 + $0x50] sm:$0xff]
        %v496 = vld [vmem:[%s3 + $0x58] sm:$0xff]
        %v497 = vld [vmem:[%s4] sm:$0x3]
        %v499 = vlaneseq
        %v500 = vshrl.u32 %v499, 7
        %v501 = vsub.s32 0, %v500
        %v502 = vrot.slane %v497, %v501
        %v503 = vlaneseq
        %v504 = vshrl.u32 %v503, 7
        %v505 = vsub.s32 1, %v504
        %v506 = vrot.slane %v497, %v505
        %v510 = vsel %vm467, %v479, 0
        %v513 = vsel %vm467, %v480, 0
        %v516 = vsel %vm467, %v481, 0
        %v519 = vsel %vm467, %v482, 0
        %v522 = vsel %vm467, %v483, 0
        %v525 = vsel %vm467, %v484, 0
        %527 = vmatprep.subr.mxu0 0.0
        %528 = vmatpush1.msra.mxu0 0.0
        %529 = vmatprep.subr.mxu0 0.0
        %530 = vmatpush1.msra.mxu0 0.0
        %531 = vmatprep.subr.mxu0 0.0
        %532 = vmatpush1.msra.mxu0 0.0
        %533 = vmatprep.subr.mxu0 0.0
        %534 = vmatpush1.msra.mxu0 0.0
        %535 = vmatprep.subr.mxu0 0.0
        %536 = vmatpush1.msra.mxu0 0.0
        %537 = vmatprep.subr.mxu0 0.0
        %538 = vmatpush1.msra.mxu0 0.0
        %539 = vmatprep.subr.mxu0 0.0
        %540 = vmatpush1.msra.mxu0 0.0
        %541 = vmatprep.subr.mxu0 0.0
        %542 = vmatpush1.msra.mxu0 0.0
        %543 = vmatprep.subr.mxu0 0.0
        %544 = vmatpush1.msra.mxu0 0.0
        %545 = vmatprep.subr.mxu0 0.0
        %546 = vmatpush1.msra.mxu0 0.0
        %547 = vmatprep.subr.mxu0 %v496
        %548 = vmatpush1.msra.mxu0 %v495
        %549 = vmatprep.subr.mxu0 %v494
        %550 = vmatpush1.msra.mxu0 %v493
        %551 = vmatprep.subr.mxu0 %v492
        %552 = vmatpush1.msra.mxu0 %v491
        %553 = vmatprep.subr.mxu0 %v490
        %554 = vmatpush1.msra.mxu0 %v489
        %555 = vmatprep.subr.mxu0 %v488
        %556 = vmatpush1.msra.mxu0 %v487
        %557 = vmatprep.subr.mxu0 %v486
        %558 = vmatpush1.msra.mxu0 %v485
        %559 = vmatprep.subr.mxu0 0.0
        %560 = vmatpush2.msra.mxu0 0.0
        %561 = vmatprep.subr.mxu0 0.0
        %562 = vmatpush2.msra.mxu0 0.0
        %563 = vmatprep.subr.mxu0 0.0
        %564 = vmatpush2.msra.mxu0 0.0
        %565 = vmatprep.subr.mxu0 0.0
        %566 = vmatpush2.msra.mxu0 0.0
        %567 = vmatprep.subr.mxu0 0.0
        %568 = vmatpush2.msra.mxu0 0.0
        %569 = vmatprep.subr.mxu0 0.0
        %570 = vmatpush2.msra.mxu0 0.0
        %571 = vmatprep.subr.mxu0 0.0
        %572 = vmatpush2.msra.mxu0 0.0
        %573 = vmatprep.subr.mxu0 0.0
        %574 = vmatpush2.msra.mxu0 0.0
        %575 = vmatprep.subr.mxu0 0.0
        %576 = vmatpush2.msra.mxu0 0.0
        %577 = vmatprep.subr.mxu0 0.0
        %578 = vmatpush2.msra.mxu0 0.0
        %579 = vmatprep.subr.mxu0 0.0
        %580 = vmatpush2.msra.mxu0 0.0
        %581 = vmatprep.subr.mxu0 0.0
        %582 = vmatpush2.msra.mxu0 0.0
        %583 = vmatprep.subr.mxu0 0.0
        %584 = vmatpush2.msra.mxu0 0.0
        %585 = vmatprep.subr.mxu0 0.0
        %586 = vmatpush2.msra.mxu0 0.0
        %587 = vmatprep.subr.mxu0 0.0
        %588 = vmatpush2.msra.mxu0 0.0
        %589 = vmatprep.subr.mxu0 0.0
        %590 = vmatpush2.msra.mxu0 0.0
        %591 = vmatprep.mubr.f32.mxu0 0.0
        %592 = vmatmul.mubr.f32.gmra.mxu0 %v510
        %v593 = vpop.f32.mrf.mxu0
        %v594 = vadd.f32 %v502, %v593
        %v595 = vpop.f32.mrf.mxu0
        %v596 = vadd.f32 %v506, %v595
        %597 = vmatprep.mubr.f32.mxu0 0.0
        %598 = vmatmul.mubr.f32.gmra.mxu0 %v513
        %v599 = vpop.f32.mrf.mxu0
        %v600 = vadd.f32 %v502, %v599
        %v601 = vpop.f32.mrf.mxu0
        %v602 = vadd.f32 %v506, %v601
        %603 = vmatprep.mubr.f32.mxu0 0.0
        %604 = vmatmul.mubr.f32.gmra.mxu0 %v516
        %v605 = vpop.f32.mrf.mxu0
        %v606 = vadd.f32 %v502, %v605
        %v607 = vpop.f32.mrf.mxu0
        %v608 = vadd.f32 %v506, %v607
        %609 = vmatprep.mubr.f32.mxu0 0.0
        %610 = vmatmul.mubr.f32.gmra.mxu0 %v519
        %v611 = vpop.f32.mrf.mxu0
        %v612 = vadd.f32 %v502, %v611
        %v613 = vpop.f32.mrf.mxu0
        %v614 = vadd.f32 %v506, %v613
        %615 = vmatprep.mubr.f32.mxu0 0.0
        %616 = vmatmul.mubr.f32.gmra.mxu0 %v522
        %v617 = vpop.f32.mrf.mxu0
        %v618 = vadd.f32 %v502, %v617
        %v619 = vpop.f32.mrf.mxu0
        %v620 = vadd.f32 %v506, %v619
        %621 = vmatprep.mubr.f32.mxu0 0.0
        %622 = vmatmul.mubr.f32.gmra.mxu0 %v525
        %v623 = vpop.f32.mrf.mxu0
        %v624 = vadd.f32 %v502, %v623
        %v625 = vpop.f32.mrf.mxu0
        %v626 = vadd.f32 %v506, %v625
        %627 = vdwg.mxu0
        %v628 = vxor.u32 %v596, 2147483648
        %v629 = vxor.u32 %v602, 2147483648
        %v630 = vxor.u32 %v608, 2147483648
        %v631 = vxor.u32 %v614, 2147483648
        %v632 = vxor.u32 %v620, 2147483648
        %v633 = vxor.u32 %v626, 2147483648
        %v634 = vmul.f32 %v628, 1.442695
        %v635 = vpow.pop %v634
        %v636 = vmul.f32 %v629, 1.442695
        %v637 = vpow.pop %v636
        %v638 = vmul.f32 %v630, 1.442695
        %v639 = vpow.pop %v638
        %v640 = vmul.f32 %v631, 1.442695
        %v641 = vpow.pop %v640
        %v642 = vmul.f32 %v632, 1.442695
        %v643 = vpow.pop %v642
        %v644 = vmul.f32 %v633, 1.442695
        %v645 = vpow.pop %v644
        %v646 = vadd.f32 %v635, 1.0
        %v647 = vadd.f32 %v637, 1.0
        %v648 = vadd.f32 %v639, 1.0
        %v649 = vadd.f32 %v641, 1.0
        %v650 = vadd.f32 %v643, 1.0
        %v651 = vadd.f32 %v645, 1.0
        %v652 = vrcp.pop %v646
        %v653 = vmul.f32 1.0, %v652
        %v654 = vrcp.pop %v647
        %v655 = vmul.f32 1.0, %v654
        %v656 = vrcp.pop %v648
        %v657 = vmul.f32 1.0, %v656
        %v658 = vrcp.pop %v649
        %v659 = vmul.f32 1.0, %v658
        %v660 = vrcp.pop %v650
        %v661 = vmul.f32 1.0, %v660
        %v662 = vrcp.pop %v651
        %v663 = vmul.f32 1.0, %v662
        %v664 = vmul.f32 %v594, %v653
        %v665 = vmul.f32 %v600, %v655
        %v666 = vmul.f32 %v606, %v657
        %v667 = vmul.f32 %v612, %v659
        %v668 = vmul.f32 %v618, %v661
        %v669 = vmul.f32 %v624, %v663
        %v670 = vlaneseq
        %v671 = vshrl.u32 %v670, 7
        %v672 = vadd.s32 %v671, 8
        %v673 = vadd.s32 %v671, 16
        %v674 = vadd.s32 %v671, 24
        %v675 = vadd.s32 %v671, 32
        %v676 = vadd.s32 %v671, 40
        %p677 = scmp.eq.s32.totalorder %s31, 0
        %vm678 = vcmp.lt.s32.totalorder %v671, 8
        %vm679 = vcmp.lt.s32.totalorder %v672, 8
        %vm680 = vcmp.lt.s32.totalorder %v673, 8
        %vm681 = vcmp.lt.s32.totalorder %v674, 8
        %vm682 = vcmp.lt.s32.totalorder %v675, 8
        %vm683 = vcmp.lt.s32.totalorder %v676, 8
        %s684 = scalar_select %p677, 1, 0
        %v685 = vstv %s684
        %vm686 = vcmp.eq.s32.totalorder %v685, 1
        %vm687 = vmand %vm686, %vm678
        %vm688 = vmand %vm686, %vm679
        %vm689 = vmand %vm686, %vm680
        %vm690 = vmand %vm686, %vm681
        %vm691 = vmand %vm686, %vm682
        %vm692 = vmand %vm686, %vm683
        %p693 = scmp.eq.s32.totalorder %s31, 3
        %vm694 = vcmp.ge.s32.totalorder %v671, 40
        %vm695 = vcmp.ge.s32.totalorder %v672, 40
        %vm696 = vcmp.ge.s32.totalorder %v673, 40
        %vm697 = vcmp.ge.s32.totalorder %v674, 40
        %vm698 = vcmp.ge.s32.totalorder %v675, 40
        %vm699 = vcmp.ge.s32.totalorder %v676, 40
        %s700 = scalar_select %p693, 1, 0
        %v701 = vstv %s700
        %vm702 = vcmp.eq.s32.totalorder %v701, 1
        %vm703 = vmand %vm702, %vm694
        %vm704 = vmand %vm702, %vm695
        %vm705 = vmand %vm702, %vm696
        %vm706 = vmand %vm702, %vm697
        %vm707 = vmand %vm702, %vm698
        %vm708 = vmand %vm702, %vm699
        %vm709 = vmor %vm687, %vm703
        %vm710 = vmor %vm688, %vm704
        %vm711 = vmor %vm689, %vm705
        %vm712 = vmor %vm690, %vm706
        %vm713 = vmor %vm691, %vm707
        %vm714 = vmor %vm692, %vm708
        %v715 = vsel %vm709, 1, 0
        %v716 = vsel %vm710, 1, 0
        %v717 = vsel %vm711, 1, 0
        %v718 = vsel %vm712, 1, 0
        %v719 = vsel %vm713, 1, 0
        %v720 = vsel %vm714, 1, 0
        %vm721 = vcmp.eq.s32.totalorder %v715, 1
        %vm722 = vcmp.eq.s32.totalorder %v716, 1
        %vm723 = vcmp.eq.s32.totalorder %v717, 1
        %vm724 = vcmp.eq.s32.totalorder %v718, 1
        %vm725 = vcmp.eq.s32.totalorder %v719, 1
        %vm726 = vcmp.eq.s32.totalorder %v720, 1
        %v727 = vsel %vm721, 0.0, %v664
        %v728 = vsel %vm722, 0.0, %v665
        %v729 = vsel %vm723, 0.0, %v666
        %v730 = vsel %vm724, 0.0, %v667
        %v731 = vsel %vm725, 0.0, %v668
        %v732 = vsel %vm726, 0.0, %v669
        %v733 = vld [vmem:[%s5] sm:$0x7f]
        %v734 = vlaneseq
        %v735 = vshrl.u32 %v734, 7
        %v736 = vsub.s32 0, %v735
        %v737 = vrot.slane %v733, %v736
        %v738 = vmul.f32 %v727, %v737
        %v739 = vmul.f32 %v728, %v737
        %v740 = vmul.f32 %v729, %v737
        %v741 = vmul.f32 %v730, %v737
        %v742 = vmul.f32 %v731, %v737
        %v743 = vlaneseq
        %v744 = vshrl.u32 %v743, 7
        %v745 = vsub.s32 1, %v744
        %v746 = vrot.slane %v733, %v745
        %v747 = vmul.f32 %v727, %v746
        %v748 = vmul.f32 %v728, %v746
        %v749 = vmul.f32 %v729, %v746
        %v750 = vmul.f32 %v730, %v746
        %v751 = vmul.f32 %v731, %v746
        %vm757 = vcmask 1046528
        %v758 = vrot.slane %v747, 1
        %v759 = vrot.slane %v748, 1
        %v760 = vsel %vm757, %v758, %v759
        %v761 = vrot.slane %v749, 1
        %v762 = vsel %vm757, %v759, %v761
        %v763 = vrot.slane %v750, 1
        %v764 = vsel %vm757, %v761, %v763
        %v765 = vrot.slane %v751, 1
        %v766 = vsel %vm757, %v763, %v765
        %v772 = vadd.f32 %v738, %v760
        %v773 = vadd.f32 %v739, %v762
        %v774 = vadd.f32 %v740, %v764
        %v775 = vadd.f32 %v741, %v766
        %v776 = vadd.f32 %v742, %v765
        %v777 = vlaneseq
        %v778 = vshrl.u32 %v777, 7
        %v779 = vsub.s32 2, %v778
        %v780 = vrot.slane %v733, %v779
        %v781 = vmul.f32 %v727, %v780
        %v782 = vmul.f32 %v728, %v780
        %v783 = vmul.f32 %v729, %v780
        %v784 = vmul.f32 %v730, %v780
        %v785 = vmul.f32 %v731, %v780
        %vm791 = vcmask 1045504
        %v792 = vrot.slane %v781, 2
        %v793 = vrot.slane %v782, 2
        %v794 = vsel %vm791, %v792, %v793
        %v795 = vrot.slane %v783, 2
        %v796 = vsel %vm791, %v793, %v795
        %v797 = vrot.slane %v784, 2
        %v798 = vsel %vm791, %v795, %v797
        %v799 = vrot.slane %v785, 2
        %v800 = vsel %vm791, %v797, %v799
        %v806 = vadd.f32 %v772, %v794
        %v807 = vadd.f32 %v773, %v796
        %v808 = vadd.f32 %v774, %v798
        %v809 = vadd.f32 %v775, %v800
        %v810 = vadd.f32 %v776, %v799
        %v811 = vlaneseq
        %v812 = vshrl.u32 %v811, 7
        %v813 = vsub.s32 3, %v812
        %v814 = vrot.slane %v733, %v813
        %v815 = vmul.f32 %v728, %v814
        %v816 = vmul.f32 %v729, %v814
        %v817 = vmul.f32 %v730, %v814
        %v818 = vmul.f32 %v731, %v814
        %vm823 = vcmask 1044480
        %v824 = vrot.slane %v815, 3
        %v825 = vrot.slane %v816, 3
        %v826 = vsel %vm823, %v824, %v825
        %v827 = vrot.slane %v817, 3
        %v828 = vsel %vm823, %v825, %v827
        %v829 = vrot.slane %v818, 3
        %v830 = vsel %vm823, %v827, %v829
        %v836 = vadd.f32 %v806, %v824
        %v837 = vadd.f32 %v807, %v826
        %v838 = vadd.f32 %v808, %v828
        %v839 = vadd.f32 %v809, %v830
        %v840 = vadd.f32 %v810, %v829
        %v841 = vlaneseq
        %v842 = vshrl.u32 %v841, 7
        %v843 = vsub.s32 4, %v842
        %v844 = vrot.slane %v733, %v843
        %v845 = vmul.f32 %v728, %v844
        %v846 = vmul.f32 %v729, %v844
        %v847 = vmul.f32 %v730, %v844
        %v848 = vmul.f32 %v731, %v844
        %v849 = vmul.f32 %v732, %v844
        %vm855 = vcmask 1043456
        %v856 = vrot.slane %v845, 4
        %v857 = vrot.slane %v846, 4
        %v858 = vsel %vm855, %v856, %v857
        %v859 = vrot.slane %v847, 4
        %v860 = vsel %vm855, %v857, %v859
        %v861 = vrot.slane %v848, 4
        %v862 = vsel %vm855, %v859, %v861
        %v863 = vrot.slane %v849, 4
        %v864 = vsel %vm855, %v861, %v863
        %v870 = vadd.f32 %v836, %v856
        %v871 = vadd.f32 %v837, %v858
        %v872 = vadd.f32 %v838, %v860
        %v873 = vadd.f32 %v839, %v862
        %v874 = vadd.f32 %v840, %v864
        %v875 = vlaneseq
        %v876 = vshrl.u32 %v875, 7
        %v877 = vsub.s32 5, %v876
        %v878 = vrot.slane %v733, %v877
        %v879 = vmul.f32 %v728, %v878
        %v880 = vmul.f32 %v729, %v878
        %v881 = vmul.f32 %v730, %v878
        %v882 = vmul.f32 %v731, %v878
        %v883 = vmul.f32 %v732, %v878
        %vm889 = vcmask 1042432
        %v890 = vrot.slane %v879, 5
        %v891 = vrot.slane %v880, 5
        %v892 = vsel %vm889, %v890, %v891
        %v893 = vrot.slane %v881, 5
        %v894 = vsel %vm889, %v891, %v893
        %v895 = vrot.slane %v882, 5
        %v896 = vsel %vm889, %v893, %v895
        %v897 = vrot.slane %v883, 5
        %v898 = vsel %vm889, %v895, %v897
        %v904 = vadd.f32 %v870, %v890
        %v905 = vadd.f32 %v871, %v892
        %v906 = vadd.f32 %v872, %v894
        %v907 = vadd.f32 %v873, %v896
        %v908 = vadd.f32 %v874, %v898
        %v909 = vlaneseq
        %v910 = vshrl.u32 %v909, 7
        %v911 = vsub.s32 6, %v910
        %v912 = vrot.slane %v733, %v911
        %v913 = vmul.f32 %v728, %v912
        %v914 = vmul.f32 %v729, %v912
        %v915 = vmul.f32 %v730, %v912
        %v916 = vmul.f32 %v731, %v912
        %v917 = vmul.f32 %v732, %v912
        %vm923 = vcmask 1041408
        %v924 = vrot.slane %v913, 6
        %v925 = vrot.slane %v914, 6
        %v926 = vsel %vm923, %v924, %v925
        %v927 = vrot.slane %v915, 6
        %v928 = vsel %vm923, %v925, %v927
        %v929 = vrot.slane %v916, 6
        %v930 = vsel %vm923, %v927, %v929
        %v931 = vrot.slane %v917, 6
        %v932 = vsel %vm923, %v929, %v931
        %v938 = vadd.f32 %v904, %v924
        %v939 = vadd.f32 %v905, %v926
        %v940 = vadd.f32 %v906, %v928
        %v941 = vadd.f32 %v907, %v930
        %v942 = vadd.f32 %v908, %v932
        %v943 = vld [vmem:[%s6] sm:$0x1]
        %v945 = vlaneseq
        %v946 = vshrl.u32 %v945, 7
        %v947 = vsub.s32 0, %v946
        %v948 = vrot.slane %v943, %v947
        %v950 = vadd.f32 %v938, %v948
        %v951 = vadd.f32 %v939, %v948
        %v952 = vadd.f32 %v940, %v948
        %v953 = vadd.f32 %v941, %v948
        %v954 = vadd.f32 %v942, %v948
        %955 = vst [vmem:[%s415 - $0x5] sm:$0xe0] %v950
        %956 = vst [vmem:[%s415 + $0x3] sm:$0xff] %v951
        %957 = vst [vmem:[%s415 + $0xb] sm:$0xff] %v952
        %958 = vst [vmem:[%s415 + $0x13] sm:$0xff] %v953
        %959 = vst [vmem:[%s415 + $0x1b] sm:$0x1f] %v954
        %v965 = vrot.slane %v950, 5
        %v966 = vrot.slane %v951, 5
        %v967 = vsel %vm889, %v965, %v966
        %v968 = vrot.slane %v952, 5
        %v969 = vsel %vm889, %v966, %v968
        %v970 = vrot.slane %v953, 5
        %v971 = vsel %vm889, %v968, %v970
        %v972 = vrot.slane %v954, 5
        %v973 = vsel %vm889, %v970, %v972
        %v978 = vadd.f32 %v967, %v969
        %v979 = vadd.f32 %v978, %v971
        %v980 = vadd.f32 %v979, %v973
        %v981 = vrot.slane %v980, 4
        %v982 = vadd.f32 %v980, %v981
        %v983 = vrot.slane %v982, 2
        %v984 = vadd.f32 %v982, %v983
        %v985 = vrot.slane %v984, 1
        %v986 = vadd.f32 %v984, %v985
        %987 = vst [vmem:[%s422] sm:$0x1] %v986
        %v988 = vmul.f32 %v950, %v950
        %v989 = vmul.f32 %v951, %v951
        %v990 = vmul.f32 %v952, %v952
        %v991 = vmul.f32 %v953, %v953
        %v992 = vmul.f32 %v954, %v954
        %v998 = vrot.slane %v988, 5
        %v999 = vrot.slane %v989, 5
        %v1000 = vsel %vm889, %v998, %v999
        %v1001 = vrot.slane %v990, 5
        %v1002 = vsel %vm889, %v999, %v1001
        %v1003 = vrot.slane %v991, 5
        %v1004 = vsel %vm889, %v1001, %v1003
        %v1005 = vrot.slane %v992, 5
        %v1006 = vsel %vm889, %v1003, %v1005
        %v1011 = vadd.f32 %v1000, %v1002
        %v1012 = vadd.f32 %v1011, %v1004
        %v1013 = vadd.f32 %v1012, %v1006
        %v1014 = vrot.slane %v1013, 4
        %v1015 = vadd.f32 %v1013, %v1014
        %v1016 = vrot.slane %v1015, 2
        %v1017 = vadd.f32 %v1015, %v1016
        %v1018 = vrot.slane %v1017, 1
        %v1019 = vadd.f32 %v1017, %v1018
        %1020 = vst [vmem:[%s422 + $0x1] sm:$0x1] %v1019
        %s1021 = sand.u32 %s232, 1
        %s1022 = scalar_lea.sflag [#allocation4], %s1021
        %s1023 = sand.u32 %s232, 1
        %s1024 = smul.addr %s1023, 32
        %s1025 = scalar_lea.vmem [#allocation3], %s1024
        %s1026 = sand.u32 %s260, 1
        %s1027 = scalar_lea.sflag [#allocation6], %s1026
        %s1028 = sand.u32 %s260, 1
        %s1029 = smul.addr %s1028, 2
        %s1030 = scalar_lea.vmem [#allocation5], %s1029
        // Predicated region
        $region49: #{tpu_custom_call.1} parent=47 // pred_check
          %p1031 = pneg %p242
        $region50: #{tpu_custom_call.1} parent=47 // pred_check_branch
          %1033 = sbr.rel (%p1031) target = $region52
        $region51: #{tpu_custom_call.1} parent=47 // pred_region
          %s1034 = smul.u32 4, %s31
          %s1036 = ssub.s32 512, 512
          %1037 = vsyncadd %s1022, %s1036
          %s1038 = smul.addr %s30, 16
          %s1039 = sadd.s32 %s1034, %s1038
          %s1040 = smul.addr %s1039, 128
          %s1041 = scalar_lea.hbm %s7, %s1040
          %s1042 = sshll.u32 %s1025, 4
          %s1043 = int_to_ptr.vmem [resolvable:$true] %s1042
          %1048 = dma.vmem_to_hbm [thread:$0]  %s1043, 512, %s1041, %s1022, 128, 128, 8
        $region52: #{tpu_custom_call.1} parent=47 // pred_fallthru
          _
        // Predicated region
        $region53: #{tpu_custom_call.1} parent=47 // pred_check
          %p1049 = pneg %p270
        $region54: #{tpu_custom_call.1} parent=47 // pred_check_branch
          %1051 = sbr.rel (%p1049) target = $region56
        $region55: #{tpu_custom_call.1} parent=47 // pred_region
          %s1053 = ssub.s32 32, 32
          %1054 = vsyncadd %s1027, %s1053
          %s1055 = smul.addr %s30, 4
          %s1056 = sadd.s32 %s31, %s1055
          %s1057 = smul.addr %s1056, 32
          %s1058 = scalar_lea.hbm %s8, %s1057
          %s1060 = sshll.u32 %s1030, 4
          %s1061 = int_to_ptr.vmem [resolvable:$true] %s1060
          %1063 = dma.vmem_to_hbm [thread:$0]  %s1061, 32, %s1058, %s1027
        $region56: #{tpu_custom_call.1} parent=47 // pred_fallthru
          _
      $region48: #{tpu_custom_call.1} parent=5 // pred_fallthru
        _
      %p1064 = scmp.le.s32.totalorder 2, %s21
      // Predicated region
      $region57: #{tpu_custom_call.1} parent=5 // pred_check
        %p1065 = pneg %p1064
      $region58: #{tpu_custom_call.1} parent=5 // pred_check_branch
        %1067 = sbr.rel (%p1065) target = $region60
      $region59: #{tpu_custom_call.1} parent=5 // pred_region
        %s1068 = ssub.s32 %s21, 2
        // Predicated region
        $region61: #{tpu_custom_call.1} parent=59 // pred_check
          %p1069 = pneg %p248
        $region62: #{tpu_custom_call.1} parent=59 // pred_check_branch
          %1071 = sbr.rel (%p1069) target = $region64
        $region63: #{tpu_custom_call.1} parent=59 // pred_region
          %s1072 = sand.u32 %s233, 1
          %s1073 = scalar_lea.sflag [#allocation4], %s1072
          %s1074 = sand.u32 %s233, 1
          %s1075 = smul.addr %s1074, 32
          %s1076 = scalar_lea.vmem [#allocation3], %s1075
          %1077 = dma.done %s1073, 512
        $region64: #{tpu_custom_call.1} parent=59 // pred_fallthru
          _
        // Predicated region
        $region65: #{tpu_custom_call.1} parent=59 // pred_check
          %p1078 = pneg %p276
        $region66: #{tpu_custom_call.1} parent=59 // pred_check_branch
          %1080 = sbr.rel (%p1078) target = $region68
        $region67: #{tpu_custom_call.1} parent=59 // pred_region
          %s1081 = sand.u32 %s261, 1
          %s1082 = scalar_lea.sflag [#allocation6], %s1081
          %s1083 = sand.u32 %s261, 1
          %s1084 = smul.addr %s1083, 2
          %s1085 = scalar_lea.vmem [#allocation5], %s1084
          %1086 = dma.done %s1082, 32
        $region68: #{tpu_custom_call.1} parent=59 // pred_fallthru
          _
      $region60: #{tpu_custom_call.1} parent=5 // pred_fallthru
        _
    $region6: #{tpu_custom_call.1} parent=1 // loop_footer
      %s25 = sadd.s32 1, %s21
    $region7: #{tpu_custom_call.1} parent=1 // loop_footer_branch
      %20 = sbr.rel target = $region3
    $region8: #{tpu_custom_call.1} parent=1 // loop_exit
      _
    %1087 = vsyncpa [#allocation4], 1
    %s1088 = scalar_lea.sflag [#allocation4], 1
    %1089 = vsyncpa %s1088, 1
    %1090 = vsyncpa [#allocation6], 1
    %s1091 = scalar_lea.sflag [#allocation6], 1
    %1092 = vsyncpa %s1091, 1

</llo_original>
